<compile_context>
chip_gen: v5e
topology: v5e:2x2
jax: 0.10.0
libtpu: 0.0.40
codegen_flags: <defaults>
</compile_context>

<pallas_src>
import functools

import jax
import jax.numpy as jnp
from jax.experimental import pallas as pl
from jax.experimental.pallas import tpu as pltpu


# ----------------------------- Pallas kernel ------------------------------- #

def _embeddings_kernel(x_ref, pos_ref, gamma_ref, beta_ref, o_ref, *, eps):
    # x_ref/pos_ref/o_ref: (TS, D); gamma_ref/beta_ref: (1, D) float32.
    h = x_ref[...] + pos_ref[...]              # add in input dtype (halves vreg
                                               # pressure for bf16 inputs)
    hf = h.astype(jnp.float32)                 # stats / normalize in f32

    inv_d = jnp.float32(1.0 / hf.shape[-1])
    s1 = jnp.sum(hf, axis=-1, keepdims=True)                 # (TS, 1)
    s2 = jnp.sum(hf * hf, axis=-1, keepdims=True)            # (TS, 1)
    u = s1 * inv_d                                           # mean
    # Clamp: E[h^2] - u^2 can cancel slightly negative -> NaN via rsqrt.
    var = jnp.maximum(s2 * inv_d - u * u, 0.0)
    inv = jax.lax.rsqrt(var + jnp.float32(eps))              # EUP rsqrt

    out = (hf - u) * inv * gamma_ref[...] + beta_ref[...]    # (TS, D)

    # Dropout is identity at inference time.
    o_ref[...] = out.astype(o_ref.dtype)


# ------------------------------ Wrapper ------------------------------------ #

def _vmem_cap_bytes():
    """Physical-VMEM-aware limit cap, leaving headroom for compiler scratch."""
    phys = None
    try:
        phys = getattr(pltpu.get_tpu_info(), "vmem_capacity_bytes", None)
    except Exception:
        phys = None
    if not phys:
        phys = 64 << 20          # conservative: assume v7x-sized VMEM
    if phys <= (64 << 20):
        return 48 << 20          # v7x: 64 MiB physical -> keep ~16 MiB headroom
    return 96 << 20              # v5e/v6e: 128 MiB physical


def _pick_tile_rows(total_rows, target_rows):
    """Full extent if it fits the target, else a fixed multiple-of-8 tile
    (edge block clipped by Pallas via a cdiv grid)."""
    if total_rows <= target_rows:
        return int(total_rows)
    return int(max(8, (target_rows // 8) * 8))


def embeddings_forward(x, pos_table, gamma, beta, *, max_norm, eps=1e-12,
                       target_block_bytes=None):
    """x: (B, S, D); pos_table: (max_len, D); gamma/beta: (D,)."""
    B, S, D = x.shape
    itemsize = jnp.dtype(x.dtype).itemsize

    # --- parameter prep (glue) ------------------------------------------- #
    # nn.Embedding(max_norm=...) lookup semantics: rows whose L2 norm exceeds
    # max_norm are rescaled to norm == max_norm.
    pos_rows = pos_table[:S].astype(jnp.float32)                 # (S, D)
    norms = jnp.sqrt(jnp.sum(pos_rows ** 2, axis=-1, keepdims=True))
    scale = jnp.minimum(1.0, max_norm / jnp.maximum(norms, 1e-30))
    pos = (pos_rows * scale).astype(x.dtype)                     # (S, D)

    # Pre-cast affine params to f32 once (no per-grid-step casts).
    gamma2 = gamma.reshape(1, D).astype(jnp.float32)
    beta2 = beta.reshape(1, D).astype(jnp.float32)

    # --- tiny-problem fast path ------------------------------------------ #
    # Fold the batch axis into rows so the whole problem is one grid step.
    total_bytes = B * S * D * itemsize
    if total_bytes <= (1 << 20):
        xk = x.reshape(1, B * S, D)
        posk = jnp.tile(pos, (B, 1))       # tiny, negligible
        Bk, Sk = 1, B * S
    else:
        xk, posk, Bk, Sk = x, pos, B, S

    # --- tiling ------------------------------------------------------------ #
    vmem_cap = _vmem_cap_bytes()
    if target_block_bytes is None:
        # 4 MiB slabs on v7x-class VMEM, 8 MiB on v5e/v6e (bigger VMEM).
        target_block_bytes = (4 << 20) if vmem_cap <= (48 << 20) else (8 << 20)
    target_rows = max(8, target_block_bytes // max(1, D * itemsize))
    ts = _pick_tile_rows(Sk, target_rows)
    ns = pl.cdiv(Sk, ts)
    grid = (ns, Bk)   # sequence tiles outer (megacore), batch inner (pos resident)

    # VMEM budget: x + out double-buffered, pos (resident across batch but
    # still double-buffered), f32 intermediates, params, plus headroom.
    tile_in = ts * D * itemsize
    tile_f32 = ts * D * 4
    need = 6 * tile_in + 4 * tile_f32 + 8 * D * 4
    vmem_limit = int(min(max(need + (8 << 20), 32 << 20), vmem_cap))

    kernel = functools.partial(_embeddings_kernel, eps=eps)

    out = pl.pallas_call(
        kernel,
        out_shape=jax.ShapeDtypeStruct((Bk, Sk, D), x.dtype),
        grid_spec=pltpu.PrefetchScalarGridSpec(
            num_scalar_prefetch=0,
            grid=grid,
            in_specs=[
                # x: batch dim squeezed, (TS, D) tile
                pl.BlockSpec((None, ts, D), lambda s, b: (b, s, 0)),
                # pos: depends only on the outer (sequence-tile) axis -> DMA
                # elided across the inner batch loop.
                pl.BlockSpec((ts, D), lambda s, b: (s, 0)),
                pl.BlockSpec((1, D), lambda s, b: (0, 0)),   # gamma (f32)
                pl.BlockSpec((1, D), lambda s, b: (0, 0)),   # beta  (f32)
            ],
            out_specs=pl.BlockSpec((None, ts, D), lambda s, b: (b, s, 0)),
        ),
        compiler_params=pltpu.CompilerParams(
            dimension_semantics=("parallel", "arbitrary"),
            vmem_limit_bytes=vmem_limit),
    )(xk, posk, gamma2, beta2)

    return out.reshape(B, S, D)


# ------------------------------ Reference ----------------------------------- #

def embeddings_ref(x, pos_table, gamma, beta, *, max_norm, eps=1e-12):
    B, S, D = x.shape
    pos_rows = pos_table[:S].astype(jnp.float32)
    norms = jnp.sqrt(jnp.sum(pos_rows ** 2, axis=-1, keepdims=True))
    scale = jnp.minimum(1.0, max_norm / jnp.maximum(norms, 1e-30))
    pos = pos_rows * scale
    h = x.astype(jnp.float32) + pos[None]
    u = jnp.mean(h, axis=-1, keepdims=True)
    s = jnp.mean((h - u) ** 2, axis=-1, keepdims=True)
    hn = (h - u) / jnp.sqrt(s + eps)
    return (gamma * hn + beta).astype(x.dtype)


# -------------------------------- Main -------------------------------------- #

if __name__ == "__main__":
    # Small cfg consistent with the module: max_len=16, dim=32, max_norm=1.0
    B, S, D = 2, 8, 32
    MAX_LEN = 16
    MAX_NORM = 1.0

    key = jax.random.PRNGKey(0)
    kx, kp = jax.random.split(key)

    x = jax.random.normal(kx, (B, S, D), dtype=jnp.float32)
    pos_table = jax.random.normal(kp, (MAX_LEN, D), dtype=jnp.float32) * 0.5
    gamma = jnp.ones((D,), dtype=jnp.float32)   # LayerNorm.gamma init
    beta = jnp.zeros((D,), dtype=jnp.float32)   # LayerNorm.beta init

    out = embeddings_forward(x, pos_table, gamma, beta, max_norm=MAX_NORM)
    out = jax.block_until_ready(out)

    ref = embeddings_ref(x, pos_table, gamma, beta, max_norm=MAX_NORM)
    assert out.shape == (B, S, D)
    assert jnp.allclose(out, ref, atol=1e-5, rtol=1e-5), "mismatch vs reference"

    print("KERNEL_OK")
</pallas_src>

<mosaic_0001>
module attributes {stable_mosaic.version = 11 : i64} {
  func.func @_embeddings_kernel(%arg0: i32, %arg1: i32, %arg2: memref<1x16x32xf32, #tpu.memory_space<vmem>>, %arg3: memref<16x32xf32, #tpu.memory_space<vmem>>, %arg4: memref<1x32xf32, #tpu.memory_space<vmem>>, %arg5: memref<1x32xf32, #tpu.memory_space<vmem>>, %arg6: memref<1x16x32xf32, #tpu.memory_space<vmem>>) attributes {dimension_semantics = [#tpu.dimension_semantics<parallel>, #tpu.dimension_semantics<arbitrary>], iteration_bounds = array<i64: 1, 1>, scalar_prefetch = 0 : i64, scratch_operands = 0 : i64, tpu.core_type = #tpu.core_type<tc>, window_params = [{transform_indices = @transform_0, window_bounds = array<i64: 1, 16, 32>}, {transform_indices = @transform_1, window_bounds = array<i64: 16, 32>}, {pipeline_mode = #tpu.pipeline_mode<synchronous>, transform_indices = @transform_2, window_bounds = array<i64: 1, 32>}, {pipeline_mode = #tpu.pipeline_mode<synchronous>, transform_indices = @transform_3, window_bounds = array<i64: 1, 32>}, {transform_indices = @transform_4, window_bounds = array<i64: 1, 16, 32>}]} {
    %c0 = arith.constant 0 : index
    %c0_0 = arith.constant 0 : index
    %c0_1 = arith.constant 0 : index
    %0 = vector.load %arg2[%c0, %c0_0, %c0_1] : memref<1x16x32xf32, #tpu.memory_space<vmem>>, vector<1x16x32xf32>
    %1 = vector.shape_cast %0 : vector<1x16x32xf32> to vector<16x32xf32>
    %c0_2 = arith.constant 0 : index
    %c0_3 = arith.constant 0 : index
    %2 = vector.load %arg3[%c0_2, %c0_3] : memref<16x32xf32, #tpu.memory_space<vmem>>, vector<16x32xf32>
    %3 = arith.addf %1, %2 : vector<16x32xf32>
    %cst = arith.constant dense<0.000000e+00> : vector<16xf32>
    %4 = vector.multi_reduction <add>, %3, %cst [1] : vector<16x32xf32> to vector<16xf32>
    %5 = vector.shape_cast %4 : vector<16xf32> to vector<16x1xf32>
    %6 = arith.mulf %3, %3 : vector<16x32xf32>
    %cst_4 = arith.constant dense<0.000000e+00> : vector<16xf32>
    %7 = vector.multi_reduction <add>, %6, %cst_4 [1] : vector<16x32xf32> to vector<16xf32>
    %8 = vector.shape_cast %7 : vector<16xf32> to vector<16x1xf32>
    %cst_5 = arith.constant 3.125000e-02 : f32
    %9 = vector.broadcast %cst_5 : f32 to vector<16x1xf32>
    %10 = arith.mulf %5, %9 : vector<16x1xf32>
    %cst_6 = arith.constant 3.125000e-02 : f32
    %11 = vector.broadcast %cst_6 : f32 to vector<16x1xf32>
    %12 = arith.mulf %8, %11 : vector<16x1xf32>
    %13 = arith.mulf %10, %10 : vector<16x1xf32>
    %14 = arith.subf %12, %13 : vector<16x1xf32>
    %cst_7 = arith.constant 0.000000e+00 : f32
    %15 = vector.broadcast %cst_7 : f32 to vector<16x1xf32>
    %16 = arith.maximumf %14, %15 : vector<16x1xf32>
    %cst_8 = arith.constant 9.99999996E-13 : f32
    %17 = vector.broadcast %cst_8 : f32 to vector<16x1xf32>
    %18 = arith.addf %16, %17 : vector<16x1xf32>
    %19 = math.rsqrt %18 : vector<16x1xf32>
    %20 = vector.broadcast %10 : vector<16x1xf32> to vector<16x32xf32>
    %21 = arith.subf %3, %20 : vector<16x32xf32>
    %22 = vector.broadcast %19 : vector<16x1xf32> to vector<16x32xf32>
    %23 = arith.mulf %21, %22 : vector<16x32xf32>
    %c0_9 = arith.constant 0 : index
    %c0_10 = arith.constant 0 : index
    %24 = vector.load %arg4[%c0_9, %c0_10] : memref<1x32xf32, #tpu.memory_space<vmem>>, vector<1x32xf32>
    %25 = vector.broadcast %24 : vector<1x32xf32> to vector<16x32xf32>
    %26 = arith.mulf %23, %25 : vector<16x32xf32>
    %c0_11 = arith.constant 0 : index
    %c0_12 = arith.constant 0 : index
    %27 = vector.load %arg5[%c0_11, %c0_12] : memref<1x32xf32, #tpu.memory_space<vmem>>, vector<1x32xf32>
    %28 = vector.broadcast %27 : vector<1x32xf32> to vector<16x32xf32>
    %29 = arith.addf %26, %28 : vector<16x32xf32>
    %c0_13 = arith.constant 0 : index
    %c0_14 = arith.constant 0 : index
    %c0_15 = arith.constant 0 : index
    %30 = vector.load %arg6[%c0_13, %c0_14, %c0_15] : memref<1x16x32xf32, #tpu.memory_space<vmem>>, vector<1x16x32xf32>
    %31 = vector.shape_cast %30 : vector<1x16x32xf32> to vector<16x32xf32>
    %32 = vector.shape_cast %29 : vector<16x32xf32> to vector<1x16x32xf32>
    tpu.vector_store %arg6[%c0_13, %c0_14, %c0_15], %32 {strides = array<i32>} : memref<1x16x32xf32, #tpu.memory_space<vmem>>, vector<1x16x32xf32>,
    return
  }
  func.func @transform_0(%arg0: i32, %arg1: i32) -> (i32, i32, i32) {
    %c0_i32 = arith.constant 0 : i32
    %c0_i32_0 = arith.constant 0 : i32
    return %arg1, %arg0, %c0_i32 : i32, i32, i32
  }
  func.func @transform_1(%arg0: i32, %arg1: i32) -> (i32, i32) {
    %c0_i32 = arith.constant 0 : i32
    %c0_i32_0 = arith.constant 0 : i32
    return %arg0, %c0_i32 : i32, i32
  }
  func.func @transform_2(%arg0: i32, %arg1: i32) -> (i32, i32) {
    %c0_i32 = arith.constant 0 : i32
    %c0_i32_0 = arith.constant 0 : i32
    %c0_i32_1 = arith.constant 0 : i32
    return %c0_i32, %c0_i32_0 : i32, i32
  }
  func.func @transform_3(%arg0: i32, %arg1: i32) -> (i32, i32) {
    %c0_i32 = arith.constant 0 : i32
    %c0_i32_0 = arith.constant 0 : i32
    %c0_i32_1 = arith.constant 0 : i32
    return %c0_i32, %c0_i32_0 : i32, i32
  }
  func.func @transform_4(%arg0: i32, %arg1: i32) -> (i32, i32, i32) {
    %c0_i32 = arith.constant 0 : i32
    %c0_i32_0 = arith.constant 0 : i32
    return %arg1, %arg0, %c0_i32 : i32, i32, i32
  }
}

</mosaic_0001>

<llo_original>
// kernel: tpu_custom_call.1
$region0: #{tpu_custom_call.1}
  #allocation0 [shape = 'u32[]', space=smem, size = 0x4, offset = 0x4, fixed_abs, tag = 'smem constant byte address 0x4 - core index']
  #allocation1 [shape = 'u32[72,128]{1,0:T(1,128)}', space=vmem, size = 0x9000, scoped, tag = 'internal scratch']
  %s0 = inlined_call_operand.hbm [shape: f32[1,16,32], index: 0, kind: input, shape index: {}]
  %s1 = inlined_call_operand.hbm [shape: f32[16,32], index: 1, kind: input, shape index: {}]
  %s2 = inlined_call_operand.vmem [shape: f32[1,32], index: 2, kind: input, shape index: {}]
  %s3 = inlined_call_operand.vmem [shape: f32[1,32], index: 3, kind: input, shape index: {}]
  %s4 = inlined_call_operand.hbm [shape: f32[1,16,32], index: 4, kind: output, shape index: {}]
  %s5 = sld [smem:[#allocation0]]
  $region34: #{tpu_custom_call.1} parent=0
    _
  %s7 = ssub.s32 1, %s5
  %s8 = scalar_select 0, %s7, %s5
  $region1: #{tpu_custom_call.1} parent=0
    #allocation2 [shape = 'u8[8192]{0}', space=vmem, size = 0x2000, scoped, tag = 'input window, operand 0, single buffered']
    #allocation3 [shape = 's32[1]{0}', space=sflag, size = 0x4, scoped, tag = 'scoped memory for tpu_custom_call.1']
    #allocation4 [shape = 's32[1]{0}', space=sflag, size = 0x4, scoped, tag = 'scoped memory for tpu_custom_call.1']
    #allocation5 [shape = 'u8[8192]{0}', space=vmem, size = 0x2000, scoped, tag = 'input window, operand 1, single buffered']
    #allocation6 [shape = 's32[1]{0}', space=sflag, size = 0x4, scoped, tag = 'scoped memory for tpu_custom_call.1']
    #allocation7 [shape = 'u8[8192]{0}', space=vmem, size = 0x2000, scoped, tag = 'output window, operand 0, single buffered']
    %9 = vsyncpa [#allocation3], 0
    %10 = vsyncpa [#allocation6], 0
    %11 = vsyncpa [#allocation4], 0
    // Predicated region
    $region2: #{tpu_custom_call.1} parent=1 // pred_check
      _
    $region3: #{tpu_custom_call.1} parent=1 // pred_check_branch
      %13 = sbr.rel (0) target = $region5
    $region4: #{tpu_custom_call.1} parent=1 // pred_region
      %15 = vsyncadd [#allocation3], 0
      %s16 = sshll.u32 %s0, 4
      %s17 = int_to_ptr.hbm [resolvable:$true] %s16
      %s18 = sshll.u32 [#allocation2], 4
      %s19 = int_to_ptr.vmem [resolvable:$true] %s18
      %24 = dma.hbm_to_vmem [thread:$0]  %s17, 256, %s19, [#allocation3], 128, 128, 8
    $region5: #{tpu_custom_call.1} parent=1 // pred_fallthru
      _
    // Predicated region
    $region6: #{tpu_custom_call.1} parent=1 // pred_check
      _
    $region7: #{tpu_custom_call.1} parent=1 // pred_check_branch
      %26 = sbr.rel (0) target = $region9
    $region8: #{tpu_custom_call.1} parent=1 // pred_region
      %28 = vsyncadd [#allocation6], 0
      %s29 = sshll.u32 %s1, 4
      %s30 = int_to_ptr.hbm [resolvable:$true] %s29
      %s31 = sshll.u32 [#allocation5], 4
      %s32 = int_to_ptr.vmem [resolvable:$true] %s31
      %37 = dma.hbm_to_vmem [thread:$0]  %s30, 256, %s32, [#allocation6], 128, 128, 8
    $region9: #{tpu_custom_call.1} parent=1 // pred_fallthru
      _
    // Predicated region
    $region10: #{tpu_custom_call.1} parent=1 // pred_check
      _
    $region11: #{tpu_custom_call.1} parent=1 // pred_check_branch
      %39 = sbr.rel (0) target = $region13
    $region12: #{tpu_custom_call.1} parent=1 // pred_region
      _
    $region13: #{tpu_custom_call.1} parent=1 // pred_fallthru
      _
    // Predicated region
    $region14: #{tpu_custom_call.1} parent=1 // pred_check
      _
    $region15: #{tpu_custom_call.1} parent=1 // pred_check_branch
      %41 = sbr.rel (0) target = $region17
    $region16: #{tpu_custom_call.1} parent=1 // pred_region
      _
    $region17: #{tpu_custom_call.1} parent=1 // pred_fallthru
      _
    // Predicated region
    $region18: #{tpu_custom_call.1} parent=1 // pred_check
      _
    $region19: #{tpu_custom_call.1} parent=1 // pred_check_branch
      %43 = sbr.rel (0) target = $region21
    $region20: #{tpu_custom_call.1} parent=1 // pred_region
      %45 = dma.done [#allocation3], 256
    $region21: #{tpu_custom_call.1} parent=1 // pred_fallthru
      _
    // Predicated region
    $region22: #{tpu_custom_call.1} parent=1 // pred_check
      _
    $region23: #{tpu_custom_call.1} parent=1 // pred_check_branch
      %47 = sbr.rel (0) target = $region25
    $region24: #{tpu_custom_call.1} parent=1 // pred_region
      %49 = dma.done [#allocation6], 256
    $region25: #{tpu_custom_call.1} parent=1 // pred_fallthru
      _
    %v50 = vld [vmem:[#allocation2] sm:$0xff]
    %v51 = vld [vmem:[#allocation2 + $0x8] sm:$0xff]
    %v52 = vld [vmem:[#allocation5] sm:$0xff]
    %v53 = vld [vmem:[#allocation5 + $0x8] sm:$0xff]
    %v54 = vadd.f32 %v50, %v52
    %v55 = vadd.f32 %v51, %v53
    %vm56 = vcmask 261120
    %v57 = vsel %vm56, %v54, 0.0
    %58 = vadd.xlane.f32.xlu0 %v57
    %v59 = vpop.xlane.xlu0 %58
    %v60 = vsel %vm56, %v55, 0.0
    %61 = vadd.xlane.f32.xlu0 %v60
    %v62 = vpop.xlane.xlu0 %61
    %v63 = vmul.f32 %v54, %v54
    %v64 = vmul.f32 %v55, %v55
    %v65 = vsel %vm56, %v63, 0.0
    %66 = vadd.xlane.f32.xlu0 %v65
    %v67 = vpop.xlane.xlu0 %66
    %v68 = vsel %vm56, %v64, 0.0
    %69 = vadd.xlane.f32.xlu0 %v68
    %v70 = vpop.xlane.xlu0 %69
    %v71 = vmul.f32 %v59, 0.03125
    %v72 = vmul.f32 %v62, 0.03125
    %v73 = vmul.f32 %v67, 0.03125
    %v74 = vmul.f32 %v70, 0.03125
    %v75 = vmul.f32 %v71, %v71
    %v76 = vmul.f32 %v72, %v72
    %v77 = vsub.f32 %v73, %v75
    %v78 = vsub.f32 %v74, %v76
    %v79 = vmax.f32 %v77, 0.0
    %v80 = vmax.f32 %v78, 0.0
    %v81 = vadd.f32 %v79, 1e-12
    %v82 = vadd.f32 %v80, 1e-12
    %v83 = vrsqrt.pop %v81
    %v84 = vmul.f32 %v83, %v81
    %v85 = vmul.f32 %v84, %v83
    %v86 = vmul.f32 0.5, %v85
    %v87 = vsub.f32 1.5, %v86
    %v88 = vmul.f32 %v83, %v87
    %vm89 = vweird.f32 %v81
    %vm90 = vweird.f32 %v83
    %vm91 = vmor %vm89, %vm90
    %v92 = vsel %vm91, %v83, %v88
    %v93 = vrsqrt.pop %v82
    %v94 = vmul.f32 %v93, %v82
    %v95 = vmul.f32 %v94, %v93
    %v96 = vmul.f32 0.5, %v95
    %v97 = vsub.f32 1.5, %v96
    %v98 = vmul.f32 %v93, %v97
    %vm99 = vweird.f32 %v82
    %vm100 = vweird.f32 %v93
    %vm101 = vmor %vm99, %vm100
    %v102 = vsel %vm101, %v93, %v98
    %v103 = vsub.f32 %v54, %v71
    %v104 = vsub.f32 %v55, %v72
    %v105 = vmul.f32 %v103, %v92
    %v106 = vmul.f32 %v104, %v102
    %v107 = vld [vmem:[%s2] sm:$0x1]
    %v109 = vperm.slane %v107, 0
    %v111 = vmul.f32 %v105, %v109
    %v112 = vmul.f32 %v106, %v109
    %v113 = vld [vmem:[%s3] sm:$0x1]
    %v115 = vperm.slane %v113, 0
    %v117 = vadd.f32 %v111, %v115
    %v118 = vadd.f32 %v112, %v115
    %119 = vst.msk [vmem:[#allocation7] sm:$0xff] %vm56, %v117
    %120 = vst.msk [vmem:[#allocation7 + $0x8] sm:$0xff] %vm56, %v118
    // Predicated region
    $region26: #{tpu_custom_call.1} parent=1 // pred_check
      _
    $region27: #{tpu_custom_call.1} parent=1 // pred_check_branch
      %122 = sbr.rel (0) target = $region29
    $region28: #{tpu_custom_call.1} parent=1 // pred_region
      %124 = vsyncadd [#allocation4], 0
      %s125 = sshll.u32 [#allocation7], 4
      %s126 = int_to_ptr.vmem [resolvable:$true] %s125
      %s127 = sshll.u32 %s4, 4
      %s128 = int_to_ptr.hbm [resolvable:$true] %s127
      %133 = dma.vmem_to_hbm [thread:$0]  %s126, 256, %s128, [#allocation4], 128, 128, 8
    $region29: #{tpu_custom_call.1} parent=1 // pred_fallthru
      _
    // Predicated region
    $region30: #{tpu_custom_call.1} parent=1 // pred_check
      _
    $region31: #{tpu_custom_call.1} parent=1 // pred_check_branch
      %135 = sbr.rel (0) target = $region33
    $region32: #{tpu_custom_call.1} parent=1 // pred_region
      %137 = dma.done [#allocation4], 256
    $region33: #{tpu_custom_call.1} parent=1 // pred_fallthru
      _
    %138 = vsyncpa [#allocation3], 1
    %139 = vsyncpa [#allocation6], 1
    %140 = vsyncpa [#allocation4], 1

</llo_original>
